<compile_context>
chip_gen: v7x
topology: tpu7x:2x2x1
jax: 0.10.0
libtpu: 0.0.40
codegen_flags: <defaults>
</compile_context>

<pallas_src>
import jax
import jax.numpy as jnp
import numpy as np
from jax.experimental import pallas as pl
from jax.experimental.pallas import tpu as pltpu


def _stochastic_depth_kernel(scale_ref, x_ref, o_ref):
    # Pure elementwise: each batch row scaled by its precomputed factor
    # (0 for dropped rows, 1/keep_prob for kept rows).  The per-row scale
    # block broadcasts across the feature dims of the x block.
    o_ref[...] = x_ref[...] * scale_ref[...].astype(x_ref.dtype)


def _row_scales(key, batch: int, keep_prob: float) -> jax.Array:
    keep = jax.random.bernoulli(key, p=keep_prob, shape=(batch,))
    # Guard p == 1.0 (keep_prob == 0): scale is exactly 0, never NaN.
    inv = (1.0 / keep_prob) if keep_prob > 0.0 else 0.0
    return keep.astype(jnp.float32) * jnp.float32(inv)


def stochastic_depth(x: jax.Array, p: float, key, training: bool = True) -> jax.Array:
    """Pallas TPU implementation of StochasticDepth.forward (per-row mode)."""
    if (not training) or p == 0.0:
        return x
    keep_prob = 1.0 - float(p)

    orig_shape = x.shape
    B = orig_shape[0]
    F = int(np.prod(orig_shape[1:])) if x.ndim > 1 else 1
    itemsize = jnp.dtype(x.dtype).itemsize
    scales = _row_scales(key, B, keep_prob)

    # ~1 MiB per block => (2 input + 2 output) buffers ~4 MiB, safe even under
    # v5e's 16 MiB default scoped VMEM and v7x's smaller physical VMEM.
    target_block_bytes = 1 << 20

    if F % 128 == 0 and (F // 128) >= 8:
        # Sublane/lane-dense path: rows reshaped to (R, 128) so every vreg is
        # a full (8, 128) tile -> dense vld/vst, DMA-roofline streaming.
        R = F // 128
        x3 = x.reshape(B, R, 128)
        s3 = scales.reshape(B, 1, 1)

        TB = min(B, 8)
        tr_cap = max(8, (target_block_bytes // (TB * 128 * itemsize)) // 8 * 8)
        TR = min(R, tr_cap)  # either the full extent R or a multiple of 8
        grid = (pl.cdiv(B, TB), pl.cdiv(R, TR))

        out = pl.pallas_call(
            _stochastic_depth_kernel,
            out_shape=jax.ShapeDtypeStruct((B, R, 128), x.dtype),
            grid=grid,
            in_specs=[
                pl.BlockSpec((TB, 1, 1), lambda i, j: (i, 0, 0)),
                pl.BlockSpec((TB, TR, 128), lambda i, j: (i, j, 0)),
            ],
            out_specs=pl.BlockSpec((TB, TR, 128), lambda i, j: (i, j, 0)),
            compiler_params=pltpu.CompilerParams(
                dimension_semantics=("parallel", "parallel"),
            ),
        )(s3, x3)
        return out.reshape(orig_shape)

    # Fallback for awkward feature sizes: keep the feature block at the full
    # (unpadded) extent -- no jnp.pad / slice passes over HBM.
    x2 = x.reshape(B, F)
    s2 = scales.reshape(B, 1)
    TB = 8 if B >= 8 else B
    grid = (pl.cdiv(B, TB),)

    out = pl.pallas_call(
        _stochastic_depth_kernel,
        out_shape=jax.ShapeDtypeStruct((B, F), x.dtype),
        grid=grid,
        in_specs=[
            pl.BlockSpec((TB, 1), lambda i: (i, 0)),
            pl.BlockSpec((TB, F), lambda i: (i, 0)),
        ],
        out_specs=pl.BlockSpec((TB, F), lambda i: (i, 0)),
        compiler_params=pltpu.CompilerParams(
            dimension_semantics=("parallel",),
        ),
    )(s2, x2)
    return out.reshape(orig_shape)


if __name__ == "__main__":
    root = jax.random.PRNGKey(0)
    data_key, mask_key = jax.random.split(root)

    B, C, H, W = 2, 4, 16, 16
    x = jax.random.normal(data_key, (B, C, H, W), dtype=jnp.float32)

    p = 0.5
    keep_prob = 1.0 - p

    # Training mode: each batch row is either zeroed or scaled by 1/keep_prob.
    y = jax.block_until_ready(stochastic_depth(x, p=p, key=mask_key, training=True))
    xn = np.asarray(x)
    yn = np.asarray(y)
    for b in range(B):
        zeroed = np.allclose(yn[b], 0.0)
        scaled = np.allclose(yn[b], xn[b] / keep_prob, rtol=1e-5, atol=1e-5)
        assert zeroed or scaled, f"row {b}: not a valid stochastic-depth output"

    # Eval mode / p == 0: identity.
    y_eval = jax.block_until_ready(stochastic_depth(x, p=p, key=mask_key, training=False))
    assert np.allclose(np.asarray(y_eval), xn)
    y_p0 = jax.block_until_ready(stochastic_depth(x, p=0.0, key=mask_key, training=True))
    assert np.allclose(np.asarray(y_p0), xn)

    # p == 1.0: all rows dropped, and no NaNs.
    y_p1 = jax.block_until_ready(stochastic_depth(x, p=1.0, key=mask_key, training=True))
    assert np.allclose(np.asarray(y_p1), 0.0)

    # Exercise the fallback path (feature size not a multiple of 128).
    x_odd = jax.random.normal(data_key, (4, 3, 5, 7), dtype=jnp.float32)
    y_odd = jax.block_until_ready(stochastic_depth(x_odd, p=p, key=mask_key, training=True))
    xo = np.asarray(x_odd)
    yo = np.asarray(y_odd)
    for b in range(xo.shape[0]):
        ok = np.allclose(yo[b], 0.0) or np.allclose(yo[b], xo[b] / keep_prob, rtol=1e-5, atol=1e-5)
        assert ok, f"fallback row {b}: not a valid stochastic-depth output"

    print("KERNEL_OK")
</pallas_src>

<mosaic_0001>
module attributes {stable_mosaic.version = 11 : i64} {
  func.func @_stochastic_depth_kernel(%arg0: i32, %arg1: i32, %arg2: memref<2x1x1xf32, #tpu.memory_space<vmem>>, %arg3: memref<2x8x128xf32, #tpu.memory_space<vmem>>, %arg4: memref<2x8x128xf32, #tpu.memory_space<vmem>>) attributes {dimension_semantics = [#tpu.dimension_semantics<parallel>, #tpu.dimension_semantics<parallel>], iteration_bounds = array<i64: 1, 1>, scalar_prefetch = 0 : i64, scratch_operands = 0 : i64, tpu.core_type = #tpu.core_type<tc>, window_params = [{transform_indices = @transform_0, window_bounds = array<i64: 2, 1, 1>}, {transform_indices = @transform_1, window_bounds = array<i64: 2, 8, 128>}, {transform_indices = @transform_2, window_bounds = array<i64: 2, 8, 128>}]} {
    %c0 = arith.constant 0 : index
    %c0_0 = arith.constant 0 : index
    %c0_1 = arith.constant 0 : index
    %0 = vector.load %arg3[%c0, %c0_0, %c0_1] : memref<2x8x128xf32, #tpu.memory_space<vmem>>, vector<2x8x128xf32>
    %c0_2 = arith.constant 0 : index
    %c0_3 = arith.constant 0 : index
    %c0_4 = arith.constant 0 : index
    %1 = vector.load %arg2[%c0_2, %c0_3, %c0_4] : memref<2x1x1xf32, #tpu.memory_space<vmem>>, vector<2x1x1xf32>
    %2 = vector.broadcast %1 : vector<2x1x1xf32> to vector<2x8x128xf32>
    %3 = arith.mulf %0, %2 : vector<2x8x128xf32>
    %c0_5 = arith.constant 0 : index
    %c0_6 = arith.constant 0 : index
    %c0_7 = arith.constant 0 : index
    %4 = vector.load %arg4[%c0_5, %c0_6, %c0_7] : memref<2x8x128xf32, #tpu.memory_space<vmem>>, vector<2x8x128xf32>
    tpu.vector_store %arg4[%c0_5, %c0_6, %c0_7], %3 {strides = array<i32>} : memref<2x8x128xf32, #tpu.memory_space<vmem>>, vector<2x8x128xf32>,
    return
  }
  func.func @transform_0(%arg0: i32, %arg1: i32) -> (i32, i32, i32) {
    %c0_i32 = arith.constant 0 : i32
    %c0_i32_0 = arith.constant 0 : i32
    %c0_i32_1 = arith.constant 0 : i32
    return %arg0, %c0_i32, %c0_i32_0 : i32, i32, i32
  }
  func.func @transform_1(%arg0: i32, %arg1: i32) -> (i32, i32, i32) {
    %c0_i32 = arith.constant 0 : i32
    %c0_i32_0 = arith.constant 0 : i32
    return %arg0, %arg1, %c0_i32 : i32, i32, i32
  }
  func.func @transform_2(%arg0: i32, %arg1: i32) -> (i32, i32, i32) {
    %c0_i32 = arith.constant 0 : i32
    %c0_i32_0 = arith.constant 0 : i32
    return %arg0, %arg1, %c0_i32 : i32, i32, i32
  }
}

</mosaic_0001>

<llo_original>
// kernel: tpu_custom_call.1
$region0: #{tpu_custom_call.1}
  #allocation0 [shape = 'u32[]', space=smem, size = 0x4, offset = 0x4, fixed_abs, tag = 'smem constant byte address 0x4 - core index']
  #allocation1 [shape = 'u32[144,128]{1,0:T(1,128)}', space=vmem, size = 0x12000, scoped, tag = 'internal scratch']
  %s0 = inlined_call_operand.vmem [shape: f32[2,1,1], index: 0, kind: input, shape index: {}]
  %s1 = inlined_call_operand.hbm [shape: f32[2,8,128], index: 1, kind: input, shape index: {}]
  %s2 = inlined_call_operand.hbm [shape: f32[2,8,128], index: 2, kind: output, shape index: {}]
  %s3 = sld [smem:[#allocation0]]
  $region22: #{tpu_custom_call.1} parent=0
    _
  %s5 = ssub.s32 1, %s3
  %s6 = scalar_select 0, %s5, %s3
  $region1: #{tpu_custom_call.1} parent=0
    #allocation2 [shape = 'u8[8192]{0}', space=vmem, size = 0x2000, scoped, tag = 'input window, operand 1, single buffered']
    #allocation3 [shape = 's32[1]{0}', space=sflag, size = 0x4, scoped, tag = 'scoped memory for tpu_custom_call.1']
    #allocation4 [shape = 's32[1]{0}', space=sflag, size = 0x4, scoped, tag = 'scoped memory for tpu_custom_call.1']
    #allocation5 [shape = 'u8[8192]{0}', space=vmem, size = 0x2000, scoped, tag = 'output window, operand 0, single buffered']
    %7 = vsyncpa [#allocation3], 0
    %8 = vsyncpa [#allocation4], 0
    // Predicated region
    $region2: #{tpu_custom_call.1} parent=1 // pred_check
      _
    $region3: #{tpu_custom_call.1} parent=1 // pred_check_branch
      %10 = sbr.rel (0) target = $region5
    $region4: #{tpu_custom_call.1} parent=1 // pred_region
      _
    $region5: #{tpu_custom_call.1} parent=1 // pred_fallthru
      _
    // Predicated region
    $region6: #{tpu_custom_call.1} parent=1 // pred_check
      _
    $region7: #{tpu_custom_call.1} parent=1 // pred_check_branch
      %12 = sbr.rel (0) target = $region9
    $region8: #{tpu_custom_call.1} parent=1 // pred_region
      %s14 = ssub.s32 256, 256
      %15 = vsyncadd [#allocation3], %s14
      %s16 = sshll.u32 [#allocation2], 4
      %s17 = int_to_ptr.vmem [resolvable:$true] %s16
      %22 = dma.hbm_to_vmem [thread:$0]  %s1, 256, %s17, [#allocation3], 128, 128, 8
    $region9: #{tpu_custom_call.1} parent=1 // pred_fallthru
      _
    // Predicated region
    $region10: #{tpu_custom_call.1} parent=1 // pred_check
      _
    $region11: #{tpu_custom_call.1} parent=1 // pred_check_branch
      %24 = sbr.rel (0) target = $region13
    $region12: #{tpu_custom_call.1} parent=1 // pred_region
      %25 = dma.done [#allocation3], 256
    $region13: #{tpu_custom_call.1} parent=1 // pred_fallthru
      _
    %v26 = vld [vmem:[#allocation2] sm:$0xff]
    %v27 = vld [vmem:[#allocation2 + $0x8] sm:$0xff]
    %v28 = vld [vmem:[%s0] sm:$0x1]
    %v29 = vld [vmem:[%s0 + $0x1] sm:$0x1]
    %v32 = vlaneseq
    %v33 = vshrl.u32 %v32, 7
    %v34 = vsub.s32 0, %v33
    %v35 = vrot.slane %v28, %v34
    %v36 = vlaneseq
    %v37 = vshrl.u32 %v36, 7
    %v38 = vsub.s32 0, %v37
    %v39 = vrot.slane %v29, %v38
    %40 = vset.pattern.permute.xlu0 0
    %41 = vperm.xlu0 %40, %v35
    %v42 = vpop.permute.xlu0 %41
    %44 = vset.pattern.permute.xlu0 0
    %45 = vperm.xlu0 %44, %v39
    %v46 = vpop.permute.xlu0 %45
    %v48 = vmul.f32 %v26, %v42
    %v49 = vmul.f32 %v27, %v46
    %50 = vst [vmem:[#allocation5] sm:$0xff] %v48
    %51 = vst [vmem:[#allocation5 + $0x8] sm:$0xff] %v49
    // Predicated region
    $region14: #{tpu_custom_call.1} parent=1 // pred_check
      _
    $region15: #{tpu_custom_call.1} parent=1 // pred_check_branch
      %53 = sbr.rel (0) target = $region17
    $region16: #{tpu_custom_call.1} parent=1 // pred_region
      %s55 = ssub.s32 256, 256
      %56 = vsyncadd [#allocation4], %s55
      %s57 = sshll.u32 [#allocation5], 4
      %s58 = int_to_ptr.vmem [resolvable:$true] %s57
      %63 = dma.vmem_to_hbm [thread:$0]  %s58, 256, %s2, [#allocation4], 128, 128, 8
    $region17: #{tpu_custom_call.1} parent=1 // pred_fallthru
      _
    // Predicated region
    $region18: #{tpu_custom_call.1} parent=1 // pred_check
      _
    $region19: #{tpu_custom_call.1} parent=1 // pred_check_branch
      %65 = sbr.rel (0) target = $region21
    $region20: #{tpu_custom_call.1} parent=1 // pred_region
      %66 = dma.done [#allocation4], 256
    $region21: #{tpu_custom_call.1} parent=1 // pred_fallthru
      _
    %67 = vsyncpa [#allocation3], 1
    %68 = vsyncpa [#allocation4], 1

</llo_original>
